<compile_context>
chip_gen: v7x
topology: tpu7x:2x2x1
jax: 0.10.0
libtpu: 0.0.40
codegen_flags: <defaults>
</compile_context>

<pallas_src>
import functools

import jax
import jax.numpy as jnp
from jax import lax
from jax.experimental import pallas as pl
from jax.experimental.pallas import tpu as pltpu


def dae_kernel(v_ref,                 # (TB, P0)  input batch tile
               w0_ref, hb0_ref,       # (P0, P1), (1, P1)
               w1_ref, hb1_ref,       # (P1, P2), (1, P2)
               vb1_ref, vb0_ref,      # (1, P1),  (1, P0)   (decoder biases, reversed order)
               out_ref):              # (TB, P0)
    f32 = jnp.float32
    v = v_ref[...]
    w0 = w0_ref[...]
    w1 = w1_ref[...]

    # ---- encode -----------------------------------------------------------
    act = jnp.dot(v, w0, preferred_element_type=f32) + hb0_ref[...]
    vp = jax.nn.sigmoid(act)                                   # f32 epilogue
    act = jnp.dot(vp.astype(w1.dtype), w1,
                  preferred_element_type=f32) + hb1_ref[...]
    # encode() returns the raw (pre-sigmoid) activation -- decode starts here.

    # ---- decode: A @ W.T via RHS-dim-1 contraction (MXU trans_b path) ------
    hp = act
    act = lax.dot_general(hp.astype(w1.dtype), w1, (((1,), (1,)), ((), ())),
                          preferred_element_type=f32) + vb1_ref[...]
    hp = jax.nn.sigmoid(act)
    act = lax.dot_general(hp.astype(w0.dtype), w0, (((1,), (1,)), ((), ())),
                          preferred_element_type=f32) + vb0_ref[...]
    out_ref[...] = jax.nn.sigmoid(act).astype(out_ref.dtype)


def _round_up(x, m):
    return ((x + m - 1) // m) * m


def dae_forward(v, W0, hB0, W1, hB1, vB0, vB1, *,
                batch_tile=256, compute_dtype=jnp.float32):
    """v: (B, D0).  W_i follows the RBM convention (visible, hidden).

    compute_dtype: dtype of the MXU operands (f32 for exactness, bf16 for
    2x MXU throughput / half the weight DMA).  Accumulation, bias add and
    sigmoid always run in f32.
    """
    B, D0 = v.shape
    D1 = W0.shape[1]
    D2 = W1.shape[1]
    assert W0.shape == (D0, D1) and W1.shape == (D1, D2)
    assert hB0.shape == (D1,) and hB1.shape == (D2,)
    assert vB0.shape == (D0,) and vB1.shape == (D1,)

    # Lane-dense padding (multiples of 128 on every feature axis).
    P0, P1, P2 = _round_up(D0, 128), _round_up(D1, 128), _round_up(D2, 128)

    # Batch tiling: tile is a multiple of 8 sublanes, batch padded to the tile.
    batch_tile = _round_up(batch_tile, 8)
    TB = min(_round_up(B, 8), batch_tile)
    Bp = _round_up(B, TB)

    f32 = jnp.float32
    pad2 = lambda a, r, c: jnp.pad(a, ((0, r - a.shape[0]), (0, c - a.shape[1])))
    v_p = pad2(v.astype(compute_dtype), Bp, P0)
    W0_p = pad2(W0.astype(compute_dtype), P0, P1)
    W1_p = pad2(W1.astype(compute_dtype), P1, P2)
    hB0_p = jnp.pad(hB0.astype(f32), (0, P1 - D1)).reshape(1, P1)
    hB1_p = jnp.pad(hB1.astype(f32), (0, P2 - D2)).reshape(1, P2)
    vB1_p = jnp.pad(vB1.astype(f32), (0, P1 - D1)).reshape(1, P1)
    vB0_p = jnp.pad(vB0.astype(f32), (0, P0 - D0)).reshape(1, P0)

    grid = (Bp // TB,)

    # Weights / biases: same block every grid step -> stay VMEM-resident.
    resident = lambda shape: pl.BlockSpec(shape, lambda i: (0, 0))

    # Advisory cost estimate for the XLA scheduler.
    flops = 2 * Bp * (P0 * P1 + P1 * P2 + P2 * P1 + P1 * P0)
    transcendentals = Bp * (P1 + P1 + P0)
    w_item = jnp.dtype(compute_dtype).itemsize
    bytes_accessed = (
        Bp * P0 * w_item                              # input
        + (P0 * P1 + P1 * P2) * w_item                # deduped weights
        + (2 * P1 + P2 + P0) * 4                      # biases (f32)
        + Bp * P0 * jnp.dtype(v.dtype).itemsize       # output
    )

    # VMEM budget: double-buffered io tiles + resident weights/biases +
    # f32 intermediates + slack.  Clamp into [32 MiB, 64 MiB] (v7x physical).
    io_bytes = 2 * 2 * TB * P0 * max(w_item, jnp.dtype(v.dtype).itemsize)
    wgt_bytes = 2 * ((P0 * P1 + P1 * P2) * w_item + (2 * P1 + P2 + P0) * 4)
    act_bytes = 4 * TB * max(P0, P1, P2) * 4
    vmem_budget = int(min(max(io_bytes + wgt_bytes + act_bytes + (4 << 20),
                              32 << 20), 64 << 20))

    out = pl.pallas_call(
        dae_kernel,
        out_shape=jax.ShapeDtypeStruct((Bp, P0), v.dtype),
        grid_spec=pltpu.PrefetchScalarGridSpec(
            num_scalar_prefetch=0,
            grid=grid,
            in_specs=[
                pl.BlockSpec((TB, P0), lambda i: (i, 0)),   # v batch tile
                resident((P0, P1)), resident((1, P1)),      # W0, hB0
                resident((P1, P2)), resident((1, P2)),      # W1, hB1
                resident((1, P1)), resident((1, P0)),       # vB1, vB0 (decode order)
            ],
            out_specs=pl.BlockSpec((TB, P0), lambda i: (i, 0)),
        ),
        compiler_params=pltpu.CompilerParams(
            dimension_semantics=("parallel",),
            vmem_limit_bytes=vmem_budget,
        ),
        cost_estimate=pl.CostEstimate(
            flops=flops,
            transcendentals=transcendentals,
            bytes_accessed=bytes_accessed,
        ),
    )(v_p, W0_p, hB0_p, W1_p, hB1_p, vB1_p, vB0_p)

    # Strip batch + lane padding.
    return out[:B, :D0]


def dae_reference(v, W0, hB0, W1, hB1, vB0, vB1):
    """Pure-JAX reference mirroring the PyTorch module."""
    act = v @ W0 + hB0
    vp = jax.nn.sigmoid(act)
    act = vp @ W1 + hB1          # encode() returns this (pre-sigmoid)
    hp = act
    act = hp @ W1.T + vB1
    hp = jax.nn.sigmoid(act)
    act = hp @ W0.T + vB0
    return jax.nn.sigmoid(act)


if __name__ == "__main__":
    # Layer sizes (visible -> hidden -> hidden); small demo shapes.
    B, D0, D1, D2 = 8, 16, 64, 32

    key = jax.random.PRNGKey(0)
    k_v, k_w0, k_w1, k_b0, k_b1, k_vb0, k_vb1 = jax.random.split(key, 7)

    v = jax.random.normal(k_v, (B, D0), dtype=jnp.float32)
    W0 = jax.random.normal(k_w0, (D0, D1), dtype=jnp.float32) * 0.1
    W1 = jax.random.normal(k_w1, (D1, D2), dtype=jnp.float32) * 0.1
    hB0 = jax.random.normal(k_b0, (D1,), dtype=jnp.float32) * 0.1
    hB1 = jax.random.normal(k_b1, (D2,), dtype=jnp.float32) * 0.1
    vB0 = jax.random.normal(k_vb0, (D0,), dtype=jnp.float32) * 0.1
    vB1 = jax.random.normal(k_vb1, (D1,), dtype=jnp.float32) * 0.1

    ref = dae_reference(v, W0, hB0, W1, hB1, vB0, vB1)

    # Exact (f32 MXU operands) path.
    out = dae_forward(v, W0, hB0, W1, hB1, vB0, vB1)
    out = jax.block_until_ready(out)
    assert out.shape == (B, D0)
    assert jnp.allclose(out, ref, atol=1e-5, rtol=1e-5)

    # bf16-operand / f32-accumulate path (2x MXU throughput on v6e/v7x).
    out_bf16 = dae_forward(v, W0, hB0, W1, hB1, vB0, vB1,
                           compute_dtype=jnp.bfloat16)
    out_bf16 = jax.block_until_ready(out_bf16)
    assert jnp.allclose(out_bf16, ref, atol=5e-2, rtol=5e-2)

    print("KERNEL_OK")
</pallas_src>

<mosaic_0001>
module attributes {stable_mosaic.version = 11 : i64} {
  func.func @dae_kernel(%arg0: i32, %arg1: memref<8x128xf32, #tpu.memory_space<vmem>>, %arg2: memref<128x128xf32, #tpu.memory_space<vmem>>, %arg3: memref<1x128xf32, #tpu.memory_space<vmem>>, %arg4: memref<128x128xf32, #tpu.memory_space<vmem>>, %arg5: memref<1x128xf32, #tpu.memory_space<vmem>>, %arg6: memref<1x128xf32, #tpu.memory_space<vmem>>, %arg7: memref<1x128xf32, #tpu.memory_space<vmem>>, %arg8: memref<8x128xf32, #tpu.memory_space<vmem>>) attributes {dimension_semantics = [#tpu.dimension_semantics<parallel>], iteration_bounds = array<i64: 1>, scalar_prefetch = 0 : i64, scratch_operands = 0 : i64, tpu.core_type = #tpu.core_type<tc>, window_params = [{transform_indices = @transform_0, window_bounds = array<i64: 8, 128>}, {pipeline_mode = #tpu.pipeline_mode<synchronous>, transform_indices = @transform_1, window_bounds = array<i64: 128, 128>}, {pipeline_mode = #tpu.pipeline_mode<synchronous>, transform_indices = @transform_2, window_bounds = array<i64: 1, 128>}, {pipeline_mode = #tpu.pipeline_mode<synchronous>, transform_indices = @transform_3, window_bounds = array<i64: 128, 128>}, {pipeline_mode = #tpu.pipeline_mode<synchronous>, transform_indices = @transform_4, window_bounds = array<i64: 1, 128>}, {pipeline_mode = #tpu.pipeline_mode<synchronous>, transform_indices = @transform_5, window_bounds = array<i64: 1, 128>}, {pipeline_mode = #tpu.pipeline_mode<synchronous>, transform_indices = @transform_6, window_bounds = array<i64: 1, 128>}, {transform_indices = @transform_7, window_bounds = array<i64: 8, 128>}]} {
    %c0 = arith.constant 0 : index
    %c0_0 = arith.constant 0 : index
    %0 = vector.load %arg1[%c0, %c0_0] : memref<8x128xf32, #tpu.memory_space<vmem>>, vector<8x128xf32>
    %c0_1 = arith.constant 0 : index
    %c0_2 = arith.constant 0 : index
    %1 = vector.load %arg2[%c0_1, %c0_2] : memref<128x128xf32, #tpu.memory_space<vmem>>, vector<128x128xf32>
    %c0_3 = arith.constant 0 : index
    %c0_4 = arith.constant 0 : index
    %2 = vector.load %arg4[%c0_3, %c0_4] : memref<128x128xf32, #tpu.memory_space<vmem>>, vector<128x128xf32>
    %cst = arith.constant dense<0.000000e+00> : vector<8x128xf32>
    %3 = tpu.matmul %0, %1, %cst {dimension_numbers = #tpu.dot_dimension_numbers<[1], [0], [0], [1], [0, 0, 1, 1], [], []>} : vector<8x128xf32>, vector<128x128xf32>, vector<8x128xf32> -> vector<8x128xf32>
    %c0_5 = arith.constant 0 : index
    %c0_6 = arith.constant 0 : index
    %4 = vector.load %arg3[%c0_5, %c0_6] : memref<1x128xf32, #tpu.memory_space<vmem>>, vector<1x128xf32>
    %5 = vector.broadcast %4 : vector<1x128xf32> to vector<8x128xf32>
    %6 = arith.addf %3, %5 : vector<8x128xf32>
    %7 = arith.negf %6 : vector<8x128xf32>
    %8 = math.exp %7 : vector<8x128xf32>
    %cst_7 = arith.constant 1.000000e+00 : f32
    %9 = vector.broadcast %cst_7 : f32 to vector<8x128xf32>
    %10 = arith.addf %9, %8 : vector<8x128xf32>
    %11 = arith.divf %9, %10 : vector<8x128xf32>
    %cst_8 = arith.constant dense<0.000000e+00> : vector<8x128xf32>
    %12 = tpu.matmul %11, %2, %cst_8 {dimension_numbers = #tpu.dot_dimension_numbers<[1], [0], [0], [1], [0, 0, 1, 1], [], []>} : vector<8x128xf32>, vector<128x128xf32>, vector<8x128xf32> -> vector<8x128xf32>
    %c0_9 = arith.constant 0 : index
    %c0_10 = arith.constant 0 : index
    %13 = vector.load %arg5[%c0_9, %c0_10] : memref<1x128xf32, #tpu.memory_space<vmem>>, vector<1x128xf32>
    %14 = vector.broadcast %13 : vector<1x128xf32> to vector<8x128xf32>
    %15 = arith.addf %12, %14 : vector<8x128xf32>
    %cst_11 = arith.constant dense<0.000000e+00> : vector<8x128xf32>
    %16 = tpu.matmul %15, %2, %cst_11 {dimension_numbers = #tpu.dot_dimension_numbers<[1], [1], [0], [0], [0, 0, 1, 0], [], []>} : vector<8x128xf32>, vector<128x128xf32>, vector<8x128xf32> -> vector<8x128xf32>
    %c0_12 = arith.constant 0 : index
    %c0_13 = arith.constant 0 : index
    %17 = vector.load %arg6[%c0_12, %c0_13] : memref<1x128xf32, #tpu.memory_space<vmem>>, vector<1x128xf32>
    %18 = vector.broadcast %17 : vector<1x128xf32> to vector<8x128xf32>
    %19 = arith.addf %16, %18 : vector<8x128xf32>
    %20 = arith.negf %19 : vector<8x128xf32>
    %21 = math.exp %20 : vector<8x128xf32>
    %cst_14 = arith.constant 1.000000e+00 : f32
    %22 = vector.broadcast %cst_14 : f32 to vector<8x128xf32>
    %23 = arith.addf %22, %21 : vector<8x128xf32>
    %24 = arith.divf %22, %23 : vector<8x128xf32>
    %cst_15 = arith.constant dense<0.000000e+00> : vector<8x128xf32>
    %25 = tpu.matmul %24, %1, %cst_15 {dimension_numbers = #tpu.dot_dimension_numbers<[1], [1], [0], [0], [0, 0, 1, 0], [], []>} : vector<8x128xf32>, vector<128x128xf32>, vector<8x128xf32> -> vector<8x128xf32>
    %c0_16 = arith.constant 0 : index
    %c0_17 = arith.constant 0 : index
    %26 = vector.load %arg7[%c0_16, %c0_17] : memref<1x128xf32, #tpu.memory_space<vmem>>, vector<1x128xf32>
    %27 = vector.broadcast %26 : vector<1x128xf32> to vector<8x128xf32>
    %28 = arith.addf %25, %27 : vector<8x128xf32>
    %29 = arith.negf %28 : vector<8x128xf32>
    %30 = math.exp %29 : vector<8x128xf32>
    %cst_18 = arith.constant 1.000000e+00 : f32
    %31 = vector.broadcast %cst_18 : f32 to vector<8x128xf32>
    %32 = arith.addf %31, %30 : vector<8x128xf32>
    %33 = arith.divf %31, %32 : vector<8x128xf32>
    %c0_19 = arith.constant 0 : index
    %c0_20 = arith.constant 0 : index
    %34 = vector.load %arg8[%c0_19, %c0_20] : memref<8x128xf32, #tpu.memory_space<vmem>>, vector<8x128xf32>
    tpu.vector_store %arg8[%c0_19, %c0_20], %33 {strides = array<i32>} : memref<8x128xf32, #tpu.memory_space<vmem>>, vector<8x128xf32>,
    return
  }
  func.func @transform_0(%arg0: i32) -> (i32, i32) {
    %c0_i32 = arith.constant 0 : i32
    %c0_i32_0 = arith.constant 0 : i32
    return %arg0, %c0_i32 : i32, i32
  }
  func.func @transform_1(%arg0: i32) -> (i32, i32) {
    %c0_i32 = arith.constant 0 : i32
    %c0_i32_0 = arith.constant 0 : i32
    %c0_i32_1 = arith.constant 0 : i32
    return %c0_i32, %c0_i32_0 : i32, i32
  }
  func.func @transform_2(%arg0: i32) -> (i32, i32) {
    %c0_i32 = arith.constant 0 : i32
    %c0_i32_0 = arith.constant 0 : i32
    %c0_i32_1 = arith.constant 0 : i32
    return %c0_i32, %c0_i32_0 : i32, i32
  }
  func.func @transform_3(%arg0: i32) -> (i32, i32) {
    %c0_i32 = arith.constant 0 : i32
    %c0_i32_0 = arith.constant 0 : i32
    %c0_i32_1 = arith.constant 0 : i32
    return %c0_i32, %c0_i32_0 : i32, i32
  }
  func.func @transform_4(%arg0: i32) -> (i32, i32) {
    %c0_i32 = arith.constant 0 : i32
    %c0_i32_0 = arith.constant 0 : i32
    %c0_i32_1 = arith.constant 0 : i32
    return %c0_i32, %c0_i32_0 : i32, i32
  }
  func.func @transform_5(%arg0: i32) -> (i32, i32) {
    %c0_i32 = arith.constant 0 : i32
    %c0_i32_0 = arith.constant 0 : i32
    %c0_i32_1 = arith.constant 0 : i32
    return %c0_i32, %c0_i32_0 : i32, i32
  }
  func.func @transform_6(%arg0: i32) -> (i32, i32) {
    %c0_i32 = arith.constant 0 : i32
    %c0_i32_0 = arith.constant 0 : i32
    %c0_i32_1 = arith.constant 0 : i32
    return %c0_i32, %c0_i32_0 : i32, i32
  }
  func.func @transform_7(%arg0: i32) -> (i32, i32) {
    %c0_i32 = arith.constant 0 : i32
    %c0_i32_0 = arith.constant 0 : i32
    return %arg0, %c0_i32 : i32, i32
  }
}

</mosaic_0001>

<llo_original>
// kernel: tpu_custom_call.1
$region0: #{tpu_custom_call.1}
  #allocation0 [shape = 'u32[]', space=smem, size = 0x4, offset = 0x4, fixed_abs, tag = 'smem constant byte address 0x4 - core index']
  #allocation1 [shape = 'u32[144,128]{1,0:T(1,128)}', space=vmem, size = 0x12000, scoped, tag = 'internal scratch']
  %s0 = inlined_call_operand.hbm [shape: f32[8,128], index: 0, kind: input, shape index: {}]
  %s1 = inlined_call_operand.hbm [shape: f32[128,128], index: 1, kind: input, shape index: {}]
  %s2 = inlined_call_operand.vmem [shape: f32[1,128], index: 2, kind: input, shape index: {}]
  %s3 = inlined_call_operand.hbm [shape: f32[128,128], index: 3, kind: input, shape index: {}]
  %s4 = inlined_call_operand.vmem [shape: f32[1,128], index: 4, kind: input, shape index: {}]
  %s5 = inlined_call_operand.vmem [shape: f32[1,128], index: 5, kind: input, shape index: {}]
  %s6 = inlined_call_operand.vmem [shape: f32[1,128], index: 6, kind: input, shape index: {}]
  %s7 = inlined_call_operand.hbm [shape: f32[8,128], index: 7, kind: output, shape index: {}]
  %s8 = sld [smem:[#allocation0]]
  $region50: #{tpu_custom_call.1} parent=0
    _
  %s10 = ssub.s32 1, %s8
  %s11 = scalar_select 0, %s10, %s8
  $region1: #{tpu_custom_call.1} parent=0
    #allocation2 [shape = 'u8[4096]{0}', space=vmem, size = 0x1000, scoped, tag = 'input window, operand 0, single buffered']
    #allocation3 [shape = 's32[1]{0}', space=sflag, size = 0x4, scoped, tag = 'scoped memory for tpu_custom_call.1']
    #allocation4 [shape = 's32[1]{0}', space=sflag, size = 0x4, scoped, tag = 'scoped memory for tpu_custom_call.1']
    #allocation5 [shape = 'u8[65536]{0}', space=vmem, size = 0x10000, scoped, tag = 'input window, operand 1, single buffered']
    #allocation6 [shape = 's32[1]{0}', space=sflag, size = 0x4, scoped, tag = 'scoped memory for tpu_custom_call.1']
    #allocation7 [shape = 'u8[65536]{0}', space=vmem, size = 0x10000, scoped, tag = 'input window, operand 3, single buffered']
    #allocation8 [shape = 'u8[4096]{0}', space=vmem, size = 0x1000, scoped, tag = 'output window, operand 0, single buffered']
    %12 = vsyncpa [#allocation3], 0
    %13 = vsyncpa [#allocation6], 0
    %14 = vsyncpa [#allocation4], 0
    // Predicated region
    $region2: #{tpu_custom_call.1} parent=1 // pred_check
      _
    $region3: #{tpu_custom_call.1} parent=1 // pred_check_branch
      %16 = sbr.rel (0) target = $region5
    $region4: #{tpu_custom_call.1} parent=1 // pred_region
      %s18 = ssub.s32 128, 128
      %19 = vsyncadd [#allocation3], %s18
      %s21 = sshll.u32 [#allocation2], 4
      %s22 = int_to_ptr.vmem [resolvable:$true] %s21
      %24 = dma.hbm_to_vmem [thread:$0]  %s0, 128, %s22, [#allocation3]
    $region5: #{tpu_custom_call.1} parent=1 // pred_fallthru
      _
    // Predicated region
    $region6: #{tpu_custom_call.1} parent=1 // pred_check
      _
    $region7: #{tpu_custom_call.1} parent=1 // pred_check_branch
      %26 = sbr.rel (0) target = $region9
    $region8: #{tpu_custom_call.1} parent=1 // pred_region
      %s28 = ssub.s32 2048, 2048
      %29 = vsyncadd [#allocation6], %s28
      %s30 = sshll.u32 [#allocation5], 4
      %s31 = int_to_ptr.vmem [resolvable:$true] %s30
      %36 = dma.hbm_to_vmem [thread:$0]  %s1, 2048, %s31, [#allocation6], 128, 128, 8
    $region9: #{tpu_custom_call.1} parent=1 // pred_fallthru
      _
    // Predicated region
    $region10: #{tpu_custom_call.1} parent=1 // pred_check
      _
    $region11: #{tpu_custom_call.1} parent=1 // pred_check_branch
      %38 = sbr.rel (0) target = $region13
    $region12: #{tpu_custom_call.1} parent=1 // pred_region
      _
    $region13: #{tpu_custom_call.1} parent=1 // pred_fallthru
      _
    // Predicated region
    $region14: #{tpu_custom_call.1} parent=1 // pred_check
      _
    $region15: #{tpu_custom_call.1} parent=1 // pred_check_branch
      %40 = sbr.rel (0) target = $region17
    $region16: #{tpu_custom_call.1} parent=1 // pred_region
      %s42 = ssub.s32 2048, 2048
      %43 = vsyncadd [#allocation6], %s42
      %s44 = sshll.u32 [#allocation7], 4
      %s45 = int_to_ptr.vmem [resolvable:$true] %s44
      %50 = dma.hbm_to_vmem [thread:$0]  %s3, 2048, %s45, [#allocation6], 128, 128, 8
    $region17: #{tpu_custom_call.1} parent=1 // pred_fallthru
      _
    // Predicated region
    $region18: #{tpu_custom_call.1} parent=1 // pred_check
      _
    $region19: #{tpu_custom_call.1} parent=1 // pred_check_branch
      %52 = sbr.rel (0) target = $region21
    $region20: #{tpu_custom_call.1} parent=1 // pred_region
      _
    $region21: #{tpu_custom_call.1} parent=1 // pred_fallthru
      _
    // Predicated region
    $region22: #{tpu_custom_call.1} parent=1 // pred_check
      _
    $region23: #{tpu_custom_call.1} parent=1 // pred_check_branch
      %54 = sbr.rel (0) target = $region25
    $region24: #{tpu_custom_call.1} parent=1 // pred_region
      _
    $region25: #{tpu_custom_call.1} parent=1 // pred_fallthru
      _
    // Predicated region
    $region26: #{tpu_custom_call.1} parent=1 // pred_check
      _
    $region27: #{tpu_custom_call.1} parent=1 // pred_check_branch
      %56 = sbr.rel (0) target = $region29
    $region28: #{tpu_custom_call.1} parent=1 // pred_region
      _
    $region29: #{tpu_custom_call.1} parent=1 // pred_fallthru
      _
    // Predicated region
    $region30: #{tpu_custom_call.1} parent=1 // pred_check
      _
    $region31: #{tpu_custom_call.1} parent=1 // pred_check_branch
      %58 = sbr.rel (0) target = $region33
    $region32: #{tpu_custom_call.1} parent=1 // pred_region
      %59 = dma.done [#allocation3], 128
    $region33: #{tpu_custom_call.1} parent=1 // pred_fallthru
      _
    // Predicated region
    $region34: #{tpu_custom_call.1} parent=1 // pred_check
      _
    $region35: #{tpu_custom_call.1} parent=1 // pred_check_branch
      %61 = sbr.rel (0) target = $region37
    $region36: #{tpu_custom_call.1} parent=1 // pred_region
      %62 = dma.done [#allocation6], 2048
    $region37: #{tpu_custom_call.1} parent=1 // pred_fallthru
      _
    // Predicated region
    $region38: #{tpu_custom_call.1} parent=1 // pred_check
      _
    $region39: #{tpu_custom_call.1} parent=1 // pred_check_branch
      %64 = sbr.rel (0) target = $region41
    $region40: #{tpu_custom_call.1} parent=1 // pred_region
      %65 = dma.done [#allocation6], 2048
    $region41: #{tpu_custom_call.1} parent=1 // pred_fallthru
      _
    %v66 = vld [vmem:[#allocation2] sm:$0xff]
    %v67 = vld [vmem:[#allocation5] sm:$0xff]
    %v68 = vld [vmem:[#allocation5 + $0x8] sm:$0xff]
    %v69 = vld [vmem:[#allocation5 + $0x10] sm:$0xff]
    %v70 = vld [vmem:[#allocation5 + $0x18] sm:$0xff]
    %v71 = vld [vmem:[#allocation5 + $0x20] sm:$0xff]
    %v72 = vld [vmem:[#allocation5 + $0x28] sm:$0xff]
    %v73 = vld [vmem:[#allocation5 + $0x30] sm:$0xff]
    %v74 = vld [vmem:[#allocation5 + $0x38] sm:$0xff]
    %v75 = vld [vmem:[#allocation5 + $0x40] sm:$0xff]
    %v76 = vld [vmem:[#allocation5 + $0x48] sm:$0xff]
    %v77 = vld [vmem:[#allocation5 + $0x50] sm:$0xff]
    %v78 = vld [vmem:[#allocation5 + $0x58] sm:$0xff]
    %v79 = vld [vmem:[#allocation5 + $0x60] sm:$0xff]
    %v80 = vld [vmem:[#allocation5 + $0x68] sm:$0xff]
    %v81 = vld [vmem:[#allocation5 + $0x70] sm:$0xff]
    %v82 = vld [vmem:[#allocation5 + $0x78] sm:$0xff]
    %v83 = vld [vmem:[#allocation7] sm:$0xff]
    %v84 = vld [vmem:[#allocation7 + $0x8] sm:$0xff]
    %v85 = vld [vmem:[#allocation7 + $0x10] sm:$0xff]
    %v86 = vld [vmem:[#allocation7 + $0x18] sm:$0xff]
    %v87 = vld [vmem:[#allocation7 + $0x20] sm:$0xff]
    %v88 = vld [vmem:[#allocation7 + $0x28] sm:$0xff]
    %v89 = vld [vmem:[#allocation7 + $0x30] sm:$0xff]
    %v90 = vld [vmem:[#allocation7 + $0x38] sm:$0xff]
    %v91 = vld [vmem:[#allocation7 + $0x40] sm:$0xff]
    %v92 = vld [vmem:[#allocation7 + $0x48] sm:$0xff]
    %v93 = vld [vmem:[#allocation7 + $0x50] sm:$0xff]
    %v94 = vld [vmem:[#allocation7 + $0x58] sm:$0xff]
    %v95 = vld [vmem:[#allocation7 + $0x60] sm:$0xff]
    %v96 = vld [vmem:[#allocation7 + $0x68] sm:$0xff]
    %v97 = vld [vmem:[#allocation7 + $0x70] sm:$0xff]
    %v98 = vld [vmem:[#allocation7 + $0x78] sm:$0xff]
    %v99 = vld [vmem:[%s2] sm:$0x1]
    %v101 = vlaneseq
    %v102 = vshrl.u32 %v101, 7
    %v103 = vsub.s32 0, %v102
    %v104 = vrot.slane %v99, %v103
    %106 = vmatprep.subr.mxu0 0.0
    %107 = vmatpush1.msra.mxu0 %v67
    %108 = vmatprep.subr.mxu0 0.0
    %109 = vmatpush1.msra.mxu0 %v68
    %110 = vmatprep.subr.mxu0 0.0
    %111 = vmatpush1.msra.mxu0 %v69
    %112 = vmatprep.subr.mxu0 0.0
    %113 = vmatpush1.msra.mxu0 %v70
    %114 = vmatprep.subr.mxu0 0.0
    %115 = vmatpush1.msra.mxu0 %v71
    %116 = vmatprep.subr.mxu0 0.0
    %117 = vmatpush1.msra.mxu0 %v72
    %118 = vmatprep.subr.mxu0 0.0
    %119 = vmatpush1.msra.mxu0 %v73
    %120 = vmatprep.subr.mxu0 0.0
    %121 = vmatpush1.msra.mxu0 %v74
    %122 = vmatprep.subr.mxu0 0.0
    %123 = vmatpush1.msra.mxu0 %v75
    %124 = vmatprep.subr.mxu0 0.0
    %125 = vmatpush1.msra.mxu0 %v76
    %126 = vmatprep.subr.mxu0 0.0
    %127 = vmatpush1.msra.mxu0 %v77
    %128 = vmatprep.subr.mxu0 0.0
    %129 = vmatpush1.msra.mxu0 %v78
    %130 = vmatprep.subr.mxu0 0.0
    %131 = vmatpush1.msra.mxu0 %v79
    %132 = vmatprep.subr.mxu0 0.0
    %133 = vmatpush1.msra.mxu0 %v80
    %134 = vmatprep.subr.mxu0 0.0
    %135 = vmatpush1.msra.mxu0 %v81
    %136 = vmatprep.subr.mxu0 0.0
    %137 = vmatpush1.msra.mxu0 %v82
    %138 = vmatprep.subr.mxu0 0.0
    %139 = vmatpush1.msra.mxu0 0.0
    %140 = vmatprep.subr.mxu0 0.0
    %141 = vmatpush1.msra.mxu0 0.0
    %142 = vmatprep.subr.mxu0 0.0
    %143 = vmatpush1.msra.mxu0 0.0
    %144 = vmatprep.subr.mxu0 0.0
    %145 = vmatpush1.msra.mxu0 0.0
    %146 = vmatprep.subr.mxu0 0.0
    %147 = vmatpush1.msra.mxu0 0.0
    %148 = vmatprep.subr.mxu0 0.0
    %149 = vmatpush1.msra.mxu0 0.0
    %150 = vmatprep.subr.mxu0 0.0
    %151 = vmatpush1.msra.mxu0 0.0
    %152 = vmatprep.subr.mxu0 0.0
    %153 = vmatpush1.msra.mxu0 0.0
    %154 = vmatprep.subr.mxu0 0.0
    %155 = vmatpush1.msra.mxu0 0.0
    %156 = vmatprep.subr.mxu0 0.0
    %157 = vmatpush1.msra.mxu0 0.0
    %158 = vmatprep.subr.mxu0 0.0
    %159 = vmatpush1.msra.mxu0 0.0
    %160 = vmatprep.subr.mxu0 0.0
    %161 = vmatpush1.msra.mxu0 0.0
    %162 = vmatprep.subr.mxu0 0.0
    %163 = vmatpush1.msra.mxu0 0.0
    %164 = vmatprep.subr.mxu0 0.0
    %165 = vmatpush1.msra.mxu0 0.0
    %166 = vmatprep.subr.mxu0 0.0
    %167 = vmatpush1.msra.mxu0 0.0
    %168 = vmatprep.subr.mxu0 0.0
    %169 = vmatpush1.msra.mxu0 0.0
    %170 = vmatprep.mubr.f32.mxu0 0.0
    %171 = vmatmul.mubr.f32.gmra.mrb[0].mxu0 %v66
    %v172 = vpop.f32.mrb[0].mxu0
    %v173 = vadd.f32 %v104, %v172
    %v174 = vpop.f32.mrb[0].mxu0
    %175 = vdwg.mxu0
    %v176 = vxor.u32 %v173, 2147483648
    %v177 = vmul.f32 %v176, 1.442695
    %v178 = vpow.pop %v177
    %v179 = vadd.f32 %v178, 1.0
    %v180 = vrcp.pop %v179
    %v181 = vmul.f32 1.0, %v180
    %v182 = vld [vmem:[%s4] sm:$0x1]
    %v184 = vlaneseq
    %v185 = vshrl.u32 %v184, 7
    %v186 = vsub.s32 0, %v185
    %v187 = vrot.slane %v182, %v186
    %189 = vmatprep.subr.mxu0 0.0
    %190 = vmatpush1.msra.mxu0 %v83
    %191 = vmatprep.subr.mxu0 0.0
    %192 = vmatpush1.msra.mxu0 %v84
    %193 = vmatprep.subr.mxu0 0.0
    %194 = vmatpush1.msra.mxu0 %v85
    %195 = vmatprep.subr.mxu0 0.0
    %196 = vmatpush1.msra.mxu0 %v86
    %197 = vmatprep.subr.mxu0 0.0
    %198 = vmatpush1.msra.mxu0 %v87
    %199 = vmatprep.subr.mxu0 0.0
    %200 = vmatpush1.msra.mxu0 %v88
    %201 = vmatprep.subr.mxu0 0.0
    %202 = vmatpush1.msra.mxu0 %v89
    %203 = vmatprep.subr.mxu0 0.0
    %204 = vmatpush1.msra.mxu0 %v90
    %205 = vmatprep.subr.mxu0 0.0
    %206 = vmatpush1.msra.mxu0 %v91
    %207 = vmatprep.subr.mxu0 0.0
    %208 = vmatpush1.msra.mxu0 %v92
    %209 = vmatprep.subr.mxu0 0.0
    %210 = vmatpush1.msra.mxu0 %v93
    %211 = vmatprep.subr.mxu0 0.0
    %212 = vmatpush1.msra.mxu0 %v94
    %213 = vmatprep.subr.mxu0 0.0
    %214 = vmatpush1.msra.mxu0 %v95
    %215 = vmatprep.subr.mxu0 0.0
    %216 = vmatpush1.msra.mxu0 %v96
    %217 = vmatprep.subr.mxu0 0.0
    %218 = vmatpush1.msra.mxu0 %v97
    %219 = vmatprep.subr.mxu0 0.0
    %220 = vmatpush1.msra.mxu0 %v98
    %221 = vmatprep.subr.mxu0 0.0
    %222 = vmatpush1.msra.mxu0 0.0
    %223 = vmatprep.subr.mxu0 0.0
    %224 = vmatpush1.msra.mxu0 0.0
    %225 = vmatprep.subr.mxu0 0.0
    %226 = vmatpush1.msra.mxu0 0.0
    %227 = vmatprep.subr.mxu0 0.0
    %228 = vmatpush1.msra.mxu0 0.0
    %229 = vmatprep.subr.mxu0 0.0
    %230 = vmatpush1.msra.mxu0 0.0
    %231 = vmatprep.subr.mxu0 0.0
    %232 = vmatpush1.msra.mxu0 0.0
    %233 = vmatprep.subr.mxu0 0.0
    %234 = vmatpush1.msra.mxu0 0.0
    %235 = vmatprep.subr.mxu0 0.0
    %236 = vmatpush1.msra.mxu0 0.0
    %237 = vmatprep.subr.mxu0 0.0
    %238 = vmatpush1.msra.mxu0 0.0
    %239 = vmatprep.subr.mxu0 0.0
    %240 = vmatpush1.msra.mxu0 0.0
    %241 = vmatprep.subr.mxu0 0.0
    %242 = vmatpush1.msra.mxu0 0.0
    %243 = vmatprep.subr.mxu0 0.0
    %244 = vmatpush1.msra.mxu0 0.0
    %245 = vmatprep.subr.mxu0 0.0
    %246 = vmatpush1.msra.mxu0 0.0
    %247 = vmatprep.subr.mxu0 0.0
    %248 = vmatpush1.msra.mxu0 0.0
    %249 = vmatprep.subr.mxu0 0.0
    %250 = vmatpush1.msra.mxu0 0.0
    %251 = vmatprep.subr.mxu0 0.0
    %252 = vmatpush1.msra.mxu0 0.0
    %253 = vmatprep.mubr.f32.mxu0 0.0
    %254 = vmatmul.mubr.f32.gmra.mrb[0].mxu0 %v181
    %v255 = vpop.f32.mrb[0].mxu0
    %v256 = vadd.f32 %v187, %v255
    %v257 = vpop.f32.mrb[0].mxu0
    %258 = vdwg.mxu0
    %v259 = vld [vmem:[%s5] sm:$0x1]
    %v261 = vlaneseq
    %v262 = vshrl.u32 %v261, 7
    %v263 = vsub.s32 0, %v262
    %v264 = vrot.slane %v259, %v263
    %266 = vmatprep.subr.mxu0 0.0
    %267 = vmatpush1.xpose.msra.mxu0 %v83
    %268 = vmatprep.subr.mxu0 0.0
    %269 = vmatpush1.xpose.msra.mxu0 %v84
    %270 = vmatprep.subr.mxu0 0.0
    %271 = vmatpush1.xpose.msra.mxu0 %v85
    %272 = vmatprep.subr.mxu0 0.0
    %273 = vmatpush1.xpose.msra.mxu0 %v86
    %274 = vmatprep.subr.mxu0 0.0
    %275 = vmatpush1.xpose.msra.mxu0 %v87
    %276 = vmatprep.subr.mxu0 0.0
    %277 = vmatpush1.xpose.msra.mxu0 %v88
    %278 = vmatprep.subr.mxu0 0.0
    %279 = vmatpush1.xpose.msra.mxu0 %v89
    %280 = vmatprep.subr.mxu0 0.0
    %281 = vmatpush1.xpose.msra.mxu0 %v90
    %282 = vmatprep.subr.mxu0 0.0
    %283 = vmatpush1.xpose.msra.mxu0 %v91
    %284 = vmatprep.subr.mxu0 0.0
    %285 = vmatpush1.xpose.msra.mxu0 %v92
    %286 = vmatprep.subr.mxu0 0.0
    %287 = vmatpush1.xpose.msra.mxu0 %v93
    %288 = vmatprep.subr.mxu0 0.0
    %289 = vmatpush1.xpose.msra.mxu0 %v94
    %290 = vmatprep.subr.mxu0 0.0
    %291 = vmatpush1.xpose.msra.mxu0 %v95
    %292 = vmatprep.subr.mxu0 0.0
    %293 = vmatpush1.xpose.msra.mxu0 %v96
    %294 = vmatprep.subr.mxu0 0.0
    %295 = vmatpush1.xpose.msra.mxu0 %v97
    %296 = vmatprep.subr.mxu0 0.0
    %297 = vmatpush1.xpose.msra.mxu0 %v98
    %298 = vmatprep.subr.mxu0 0.0
    %299 = vmatpush1.xpose.msra.mxu0 0.0
    %300 = vmatprep.subr.mxu0 0.0
    %301 = vmatpush1.xpose.msra.mxu0 0.0
    %302 = vmatprep.subr.mxu0 0.0
    %303 = vmatpush1.xpose.msra.mxu0 0.0
    %304 = vmatprep.subr.mxu0 0.0
    %305 = vmatpush1.xpose.msra.mxu0 0.0
    %306 = vmatprep.subr.mxu0 0.0
    %307 = vmatpush1.xpose.msra.mxu0 0.0
    %308 = vmatprep.subr.mxu0 0.0
    %309 = vmatpush1.xpose.msra.mxu0 0.0
    %310 = vmatprep.subr.mxu0 0.0
    %311 = vmatpush1.xpose.msra.mxu0 0.0
    %312 = vmatprep.subr.mxu0 0.0
    %313 = vmatpush1.xpose.msra.mxu0 0.0
    %314 = vmatprep.subr.mxu0 0.0
    %315 = vmatpush1.xpose.msra.mxu0 0.0
    %316 = vmatprep.subr.mxu0 0.0
    %317 = vmatpush1.xpose.msra.mxu0 0.0
    %318 = vmatprep.subr.mxu0 0.0
    %319 = vmatpush1.xpose.msra.mxu0 0.0
    %320 = vmatprep.subr.mxu0 0.0
    %321 = vmatpush1.xpose.msra.mxu0 0.0
    %322 = vmatprep.subr.mxu0 0.0
    %323 = vmatpush1.xpose.msra.mxu0 0.0
    %324 = vmatprep.subr.mxu0 0.0
    %325 = vmatpush1.xpose.msra.mxu0 0.0
    %326 = vmatprep.subr.mxu0 0.0
    %327 = vmatpush1.xpose.msra.mxu0 0.0
    %328 = vmatprep.subr.mxu0 0.0
    %329 = vmatpush1.xpose.msra.mxu0 0.0
    %330 = vmatprep.mubr.f32.mxu0 0.0
    %331 = vmatmul.mubr.f32.gmra.mrb[0].mxu0 %v256
    %v332 = vpop.f32.mrb[0].mxu0
    %v333 = vadd.f32 %v264, %v332
    %v334 = vpop.f32.mrb[0].mxu0
    %335 = vdwg.mxu0
    %v336 = vxor.u32 %v333, 2147483648
    %v337 = vmul.f32 %v336, 1.442695
    %v338 = vpow.pop %v337
    %v339 = vadd.f32 %v338, 1.0
    %v340 = vrcp.pop %v339
    %v341 = vmul.f32 1.0, %v340
    %v342 = vld [vmem:[%s6] sm:$0x1]
    %v344 = vlaneseq
    %v345 = vshrl.u32 %v344, 7
    %v346 = vsub.s32 0, %v345
    %v347 = vrot.slane %v342, %v346
    %349 = vmatprep.subr.mxu0 0.0
    %350 = vmatpush1.xpose.msra.mxu0 %v67
    %351 = vmatprep.subr.mxu0 0.0
    %352 = vmatpush1.xpose.msra.mxu0 %v68
    %353 = vmatprep.subr.mxu0 0.0
    %354 = vmatpush1.xpose.msra.mxu0 %v69
    %355 = vmatprep.subr.mxu0 0.0
    %356 = vmatpush1.xpose.msra.mxu0 %v70
    %357 = vmatprep.subr.mxu0 0.0
    %358 = vmatpush1.xpose.msra.mxu0 %v71
    %359 = vmatprep.subr.mxu0 0.0
    %360 = vmatpush1.xpose.msra.mxu0 %v72
    %361 = vmatprep.subr.mxu0 0.0
    %362 = vmatpush1.xpose.msra.mxu0 %v73
    %363 = vmatprep.subr.mxu0 0.0
    %364 = vmatpush1.xpose.msra.mxu0 %v74
    %365 = vmatprep.subr.mxu0 0.0
    %366 = vmatpush1.xpose.msra.mxu0 %v75
    %367 = vmatprep.subr.mxu0 0.0
    %368 = vmatpush1.xpose.msra.mxu0 %v76
    %369 = vmatprep.subr.mxu0 0.0
    %370 = vmatpush1.xpose.msra.mxu0 %v77
    %371 = vmatprep.subr.mxu0 0.0
    %372 = vmatpush1.xpose.msra.mxu0 %v78
    %373 = vmatprep.subr.mxu0 0.0
    %374 = vmatpush1.xpose.msra.mxu0 %v79
    %375 = vmatprep.subr.mxu0 0.0
    %376 = vmatpush1.xpose.msra.mxu0 %v80
    %377 = vmatprep.subr.mxu0 0.0
    %378 = vmatpush1.xpose.msra.mxu0 %v81
    %379 = vmatprep.subr.mxu0 0.0
    %380 = vmatpush1.xpose.msra.mxu0 %v82
    %381 = vmatprep.subr.mxu0 0.0
    %382 = vmatpush1.xpose.msra.mxu0 0.0
    %383 = vmatprep.subr.mxu0 0.0
    %384 = vmatpush1.xpose.msra.mxu0 0.0
    %385 = vmatprep.subr.mxu0 0.0
    %386 = vmatpush1.xpose.msra.mxu0 0.0
    %387 = vmatprep.subr.mxu0 0.0
    %388 = vmatpush1.xpose.msra.mxu0 0.0
    %389 = vmatprep.subr.mxu0 0.0
    %390 = vmatpush1.xpose.msra.mxu0 0.0
    %391 = vmatprep.subr.mxu0 0.0
    %392 = vmatpush1.xpose.msra.mxu0 0.0
    %393 = vmatprep.subr.mxu0 0.0
    %394 = vmatpush1.xpose.msra.mxu0 0.0
    %395 = vmatprep.subr.mxu0 0.0
    %396 = vmatpush1.xpose.msra.mxu0 0.0
    %397 = vmatprep.subr.mxu0 0.0
    %398 = vmatpush1.xpose.msra.mxu0 0.0
    %399 = vmatprep.subr.mxu0 0.0
    %400 = vmatpush1.xpose.msra.mxu0 0.0
    %401 = vmatprep.subr.mxu0 0.0
    %402 = vmatpush1.xpose.msra.mxu0 0.0
    %403 = vmatprep.subr.mxu0 0.0
    %404 = vmatpush1.xpose.msra.mxu0 0.0
    %405 = vmatprep.subr.mxu0 0.0
    %406 = vmatpush1.xpose.msra.mxu0 0.0
    %407 = vmatprep.subr.mxu0 0.0
    %408 = vmatpush1.xpose.msra.mxu0 0.0
    %409 = vmatprep.subr.mxu0 0.0
    %410 = vmatpush1.xpose.msra.mxu0 0.0
    %411 = vmatprep.subr.mxu0 0.0
    %412 = vmatpush1.xpose.msra.mxu0 0.0
    %413 = vmatprep.mubr.f32.mxu0 0.0
    %414 = vmatmul.mubr.f32.gmra.mrb[0].mxu0 %v341
    %v415 = vpop.f32.mrb[0].mxu0
    %v416 = vadd.f32 %v347, %v415
    %v417 = vpop.f32.mrb[0].mxu0
    %418 = vdwg.mxu0
    %v419 = vxor.u32 %v416, 2147483648
    %v420 = vmul.f32 %v419, 1.442695
    %v421 = vpow.pop %v420
    %v422 = vadd.f32 %v421, 1.0
    %v423 = vrcp.pop %v422
    %v424 = vmul.f32 1.0, %v423
    %425 = vst [vmem:[#allocation8] sm:$0xff] %v424
    // Predicated region
    $region42: #{tpu_custom_call.1} parent=1 // pred_check
      _
    $region43: #{tpu_custom_call.1} parent=1 // pred_check_branch
      %427 = sbr.rel (0) target = $region45
    $region44: #{tpu_custom_call.1} parent=1 // pred_region
      %s429 = ssub.s32 128, 128
      %430 = vsyncadd [#allocation4], %s429
      %s432 = sshll.u32 [#allocation8], 4
      %s433 = int_to_ptr.vmem [resolvable:$true] %s432
      %435 = dma.vmem_to_hbm [thread:$0]  %s433, 128, %s7, [#allocation4]
    $region45: #{tpu_custom_call.1} parent=1 // pred_fallthru
      _
    // Predicated region
    $region46: #{tpu_custom_call.1} parent=1 // pred_check
      _
    $region47: #{tpu_custom_call.1} parent=1 // pred_check_branch
      %437 = sbr.rel (0) target = $region49
    $region48: #{tpu_custom_call.1} parent=1 // pred_region
      %438 = dma.done [#allocation4], 128
    $region49: #{tpu_custom_call.1} parent=1 // pred_fallthru
      _
    %439 = vsyncpa [#allocation3], 1
    %440 = vsyncpa [#allocation6], 1
    %441 = vsyncpa [#allocation4], 1

</llo_original>
